<compile_context>
chip_gen: v5e
topology: v5e:2x2
jax: 0.10.0
libtpu: 0.0.40
codegen_flags: <defaults>
</compile_context>

<pallas_src>
import jax
import jax.numpy as jnp
from jax.experimental import pallas as pl
from jax.experimental.pallas import tpu as pltpu


def _block_kernel(x_ref, w1_ref, b1_ref, w2_ref, b2_ref, wu_ref, bu_ref,
                  sew1_ref, seb1_ref, sew2_ref, seb2_ref, o_ref):
    """One batch sample: x_ref (Cin, T) -> o_ref (C, T).  Time is the lane axis."""
    f32 = jnp.float32
    t = x_ref.shape[-1]

    lane = jax.lax.broadcasted_iota(jnp.int32, (1, t), 1)
    is_first = lane == 0
    is_last = lane == (t - 1)

    def conv3(h, w_ref, b_ref):
        # k=3 / pad=1 conv as three accumulated MXU dots (no lane repacking,
        # K stays Cin/C regardless of 128-alignment).  w_ref: (3, Cout, Cin).
        cd = w_ref.dtype
        h_prev = jnp.where(is_first, 0.0, pltpu.roll(h, shift=1, axis=1))
        h_next = jnp.where(is_last, 0.0, pltpu.roll(h, shift=t - 1, axis=1))
        acc = jnp.dot(w_ref[0], h_prev.astype(cd), preferred_element_type=f32)
        acc = acc + jnp.dot(w_ref[1], h.astype(cd), preferred_element_type=f32)
        acc = acc + jnp.dot(w_ref[2], h_next.astype(cd), preferred_element_type=f32)
        return acc + b_ref[...]

    x = x_ref[...].astype(f32)                                        # (Cin, T)

    # conv1 (+ folded bn1) + relu6, then conv2 (+ folded bn2).
    h1 = jnp.clip(conv3(x, w1_ref, b1_ref), 0.0, 6.0)                 # (C, T)
    h2 = conv3(h1, w2_ref, b2_ref)                                    # (C, T)

    # SE: squeeze over time, excite with two 1x1 convs (tiny; kept in f32).
    z = jnp.mean(h2, axis=1, keepdims=True)                           # (C, 1)
    zh = jnp.clip(jnp.dot(sew1_ref[...], z, preferred_element_type=f32)
                  + seb1_ref[...], 0.0, 6.0)                          # (Cse, 1)
    gate = jax.nn.sigmoid(jnp.dot(sew2_ref[...], zh, preferred_element_type=f32)
                          + seb2_ref[...])                            # (C, 1)

    # Downsample residual: 1x1 conv (+ folded bn) as its own small K=Cin dot.
    r = (jnp.dot(wu_ref[...], x.astype(wu_ref.dtype), preferred_element_type=f32)
         + bu_ref[...])                                               # (C, T)

    # gate * h2 + residual, then act2 (relu6).
    o_ref[...] = jnp.clip(h2 * gate + r, 0.0, 6.0).astype(o_ref.dtype)


def _prepare_weights(p, compute_dtype):
    """Trace-time weight prep: fold BN scales, lay conv weights out as
    (K, Cout, Cin) so w[k] is one MXU operand, cast conv weights to
    compute_dtype.  Biases and the tiny SE weights stay f32."""
    f32 = jnp.float32
    C, Cin, K = p["w1"].shape
    assert K == 3
    cse = p["sew1"].shape[0]

    w1 = jnp.transpose(p["w1"] * p["s1"][:, None, None], (2, 0, 1)).astype(compute_dtype)
    b1 = p["b1"].reshape(C, 1).astype(f32)
    w2 = jnp.transpose(p["w2"] * p["s2"][:, None, None], (2, 0, 1)).astype(compute_dtype)
    b2 = p["b2"].reshape(C, 1).astype(f32)

    wu = (p["wu"] * p["su"][:, None]).astype(compute_dtype)           # (C, Cin)
    bu = p["bu"].reshape(C, 1).astype(f32)

    sew1 = p["sew1"].astype(f32)                                      # (Cse, C)
    seb1 = p["seb1"].reshape(cse, 1).astype(f32)
    sew2 = p["sew2"].astype(f32)                                      # (C, Cse)
    seb2 = p["seb2"].reshape(C, 1).astype(f32)
    return [w1, b1, w2, b2, wu, bu, sew1, seb1, sew2, seb2]


def _padded_vmem_bytes(shape, itemsize):
    """Rough VMEM bytes of one buffer after (8,128) tiling / lane padding."""
    shape = tuple(int(d) for d in shape)
    if len(shape) < 2:
        shape = (1,) * (2 - len(shape)) + shape
    lead = 1
    for d in shape[:-2]:
        lead *= d
    sub = -(-shape[-2] // 8) * 8
    lane = -(-shape[-1] // 128) * 128
    return lead * sub * lane * itemsize


def se_resnet1d_basic_block(x_ncl, params, *, compute_dtype=jnp.bfloat16):
    """x_ncl: (B, Cin, T) in PyTorch NCL layout.  Returns (B, C, T) float32."""
    B, Cin, T = x_ncl.shape
    C = params["w1"].shape[0]

    weights = _prepare_weights(params, compute_dtype)

    # Explicit per-grid-step VMEM footprint estimate -> vmem_limit_bytes and a
    # "does this config fit" check (weights are counted double-buffered; the
    # constant-index blocks are fetched only once, but the buffers are paid).
    est = 0
    est += 2 * _padded_vmem_bytes((Cin, T), x_ncl.dtype.itemsize)     # input block
    est += 2 * _padded_vmem_bytes((C, T), 4)                          # output block
    est += 2 * sum(_padded_vmem_bytes(a.shape, a.dtype.itemsize) for a in weights)
    est += 10 * _padded_vmem_bytes((C, T), 4)                         # live f32 intermediates
    est += 4 * _padded_vmem_bytes((Cin, T), 4)                        # x taps
    est += 2 << 20                                                    # compiler scratch slack

    # TODO(synk): for very long T restructure as a two-pass SE (accumulate the
    # per-sample time-sum over a T grid axis, then a second sweep applies the
    # gate + residual) so the footprint becomes T-independent.
    if est > (44 << 20):
        raise ValueError(
            f"Estimated per-step VMEM footprint {est / 2**20:.1f} MiB exceeds "
            "the ~44 MiB budget that is safe on v7x (64 MiB physical VMEM).")
    vmem_limit = int(min(48 << 20, max(est, 32 << 20)))

    def const_spec(a):
        nd = a.ndim
        return pl.BlockSpec(a.shape, lambda b, _nd=nd: (0,) * _nd)

    out = pl.pallas_call(
        _block_kernel,
        out_shape=jax.ShapeDtypeStruct((B, C, T), jnp.float32),
        grid=(B,),    # one sample / step: max grid steps, B-independent footprint
        in_specs=[pl.BlockSpec((None, Cin, T), lambda b: (b, 0, 0))]
                 + [const_spec(a) for a in weights],
        out_specs=pl.BlockSpec((None, C, T), lambda b: (b, 0, 0)),
        compiler_params=pltpu.CompilerParams(
            dimension_semantics=("parallel",),
            vmem_limit_bytes=vmem_limit),
    )(x_ncl, *weights)
    return out


def _reference(x, p):
    """Pure-JAX reference mirroring the PyTorch forward (NCL layout)."""
    T = x.shape[-1]

    def convk3(z, w):          # w: (O, I, 3), padding=1, stride=1
        zp = jnp.pad(z, ((0, 0), (0, 0), (1, 1)))
        return sum(jnp.einsum("bct,oc->bot", zp[:, :, k:k + T], w[:, :, k])
                   for k in range(3))

    def conv1x1(z, w):
        return jnp.einsum("bct,oc->bot", z, w)

    def bn(z, s, b):
        return z * s[None, :, None] + b[None, :, None]

    h = jnp.clip(bn(convk3(x, p["w1"]), p["s1"], p["b1"]), 0.0, 6.0)  # conv1+bn1+act1
    h = bn(convk3(h, p["w2"]), p["s2"], p["b2"])                       # conv2+bn2
    z = jnp.mean(h, axis=2, keepdims=True)                             # SE squeeze
    zh = jnp.clip(conv1x1(z, p["sew1"]) + p["seb1"][None, :, None], 0.0, 6.0)
    gate = jax.nn.sigmoid(conv1x1(zh, p["sew2"]) + p["seb2"][None, :, None])
    h = h * gate
    r = bn(conv1x1(x, p["wu"]), p["su"], p["bu"])                      # downsample
    return jnp.clip(h + r, 0.0, 6.0)                                   # add + act2


def _make_params(key, in_channels, channels, se_r, kernel_size=3):
    se_c = channels // se_r
    keys = jax.random.split(key, 10)
    eps = 1e-5

    def folded_bn(k, c):
        kg, kb, km, kv = jax.random.split(k, 4)
        gamma = 1.0 + 0.1 * jax.random.normal(kg, (c,), jnp.float32)
        beta = 0.1 * jax.random.normal(kb, (c,), jnp.float32)
        mean = 0.1 * jax.random.normal(km, (c,), jnp.float32)
        var = jnp.abs(jax.random.normal(kv, (c,), jnp.float32)) + 0.5
        s = gamma / jnp.sqrt(var + eps)
        b = beta - mean * s
        return s, b

    s1, b1 = folded_bn(keys[0], channels)
    s2, b2 = folded_bn(keys[1], channels)
    su, bu = folded_bn(keys[2], channels)

    return {
        "w1": 0.2 * jax.random.normal(keys[3], (channels, in_channels, kernel_size), jnp.float32),
        "s1": s1, "b1": b1,
        "w2": 0.2 * jax.random.normal(keys[4], (channels, channels, kernel_size), jnp.float32),
        "s2": s2, "b2": b2,
        "wu": 0.2 * jax.random.normal(keys[5], (channels, in_channels), jnp.float32),
        "su": su, "bu": bu,
        "sew1": 0.2 * jax.random.normal(keys[6], (se_c, channels), jnp.float32),
        "seb1": 0.1 * jax.random.normal(keys[7], (se_c,), jnp.float32),
        "sew2": 0.2 * jax.random.normal(keys[8], (channels, se_c), jnp.float32),
        "seb2": 0.1 * jax.random.normal(keys[9], (channels,), jnp.float32),
    }


if __name__ == "__main__":
    B, in_channels, T = 4, 16, 32
    channels, se_r = 32, 4

    key = jax.random.PRNGKey(0)
    kx, kp = jax.random.split(key)
    x = jax.random.normal(kx, (B, in_channels, T), jnp.float32)        # PyTorch NCL
    params = _make_params(kp, in_channels, channels, se_r)

    ref = _reference(x, params)

    # Structural check: f32-matmul path must match the pure-JAX reference tightly.
    out_f32 = jax.block_until_ready(
        se_resnet1d_basic_block(x, params, compute_dtype=jnp.float32))
    assert out_f32.shape == (B, channels, T), out_f32.shape
    err_f32 = float(jnp.max(jnp.abs(out_f32 - ref)))
    assert jnp.allclose(out_f32, ref, atol=1e-3, rtol=1e-3), err_f32

    # Default bf16-MXU path: quantization-level tolerance (bit-accuracy is
    # already established by the f32 run above).
    out = jax.block_until_ready(se_resnet1d_basic_block(x, params))
    assert out.shape == (B, channels, T), out.shape
    err_bf16 = float(jnp.max(jnp.abs(out - ref)))
    assert jnp.allclose(out, ref, atol=1e-1, rtol=1e-1), err_bf16

    print("KERNEL_OK")
</pallas_src>

<mosaic_0001>
module attributes {stable_mosaic.version = 11 : i64} {
  func.func @_block_kernel(%arg0: i32, %arg1: memref<1x16x32xf32, #tpu.memory_space<vmem>>, %arg2: memref<3x32x16xf32, #tpu.memory_space<vmem>>, %arg3: memref<32x1xf32, #tpu.memory_space<vmem>>, %arg4: memref<3x32x32xf32, #tpu.memory_space<vmem>>, %arg5: memref<32x1xf32, #tpu.memory_space<vmem>>, %arg6: memref<32x16xf32, #tpu.memory_space<vmem>>, %arg7: memref<32x1xf32, #tpu.memory_space<vmem>>, %arg8: memref<8x32xf32, #tpu.memory_space<vmem>>, %arg9: memref<8x1xf32, #tpu.memory_space<vmem>>, %arg10: memref<32x8xf32, #tpu.memory_space<vmem>>, %arg11: memref<32x1xf32, #tpu.memory_space<vmem>>, %arg12: memref<1x32x32xf32, #tpu.memory_space<vmem>>) attributes {dimension_semantics = [#tpu.dimension_semantics<parallel>], iteration_bounds = array<i64: 4>, scalar_prefetch = 0 : i64, scratch_operands = 0 : i64, tpu.core_type = #tpu.core_type<tc>, window_params = [{transform_indices = @transform_0, window_bounds = array<i64: 1, 16, 32>}, {pipeline_mode = #tpu.pipeline_mode<synchronous>, transform_indices = @transform_1, window_bounds = array<i64: 3, 32, 16>}, {pipeline_mode = #tpu.pipeline_mode<synchronous>, transform_indices = @transform_2, window_bounds = array<i64: 32, 1>}, {pipeline_mode = #tpu.pipeline_mode<synchronous>, transform_indices = @transform_3, window_bounds = array<i64: 3, 32, 32>}, {pipeline_mode = #tpu.pipeline_mode<synchronous>, transform_indices = @transform_4, window_bounds = array<i64: 32, 1>}, {pipeline_mode = #tpu.pipeline_mode<synchronous>, transform_indices = @transform_5, window_bounds = array<i64: 32, 16>}, {pipeline_mode = #tpu.pipeline_mode<synchronous>, transform_indices = @transform_6, window_bounds = array<i64: 32, 1>}, {pipeline_mode = #tpu.pipeline_mode<synchronous>, transform_indices = @transform_7, window_bounds = array<i64: 8, 32>}, {pipeline_mode = #tpu.pipeline_mode<synchronous>, transform_indices = @transform_8, window_bounds = array<i64: 8, 1>}, {pipeline_mode = #tpu.pipeline_mode<synchronous>, transform_indices = @transform_9, window_bounds = array<i64: 32, 8>}, {pipeline_mode = #tpu.pipeline_mode<synchronous>, transform_indices = @transform_10, window_bounds = array<i64: 32, 1>}, {transform_indices = @transform_11, window_bounds = array<i64: 1, 32, 32>}]} {
    %0 = tpu.iota {dimensions = array<i32: 1>} : vector<1x32xi32>
    %c0_i32 = arith.constant 0 : i32
    %1 = vector.broadcast %c0_i32 : i32 to vector<1x32xi32>
    %2 = arith.cmpi eq, %0, %1 : vector<1x32xi32>
    %c31_i32 = arith.constant 31 : i32
    %3 = vector.broadcast %c31_i32 : i32 to vector<1x32xi32>
    %4 = arith.cmpi eq, %0, %3 : vector<1x32xi32>
    %c0 = arith.constant 0 : index
    %c0_0 = arith.constant 0 : index
    %c0_1 = arith.constant 0 : index
    %5 = vector.load %arg1[%c0, %c0_0, %c0_1] : memref<1x16x32xf32, #tpu.memory_space<vmem>>, vector<1x16x32xf32>
    %6 = vector.shape_cast %5 : vector<1x16x32xf32> to vector<16x32xf32>
    %c1_i32 = arith.constant 1 : i32
    %7 = tpu.dynamic_rotate %6 by %c1_i32 dim 1 : vector<16x32xf32>, i32 -> vector<16x32xf32>
    %cst = arith.constant 0.000000e+00 : f32
    %8 = vector.shape_cast %2 : vector<1x32xi1> to vector<1x32xi1>
    %9 = vector.broadcast %8 : vector<1x32xi1> to vector<16x32xi1>
    %10 = vector.broadcast %cst : f32 to vector<16x32xf32>
    %11 = arith.select %9, %10, %7 : vector<16x32xi1>, vector<16x32xf32>
    %c31_i32_2 = arith.constant 31 : i32
    %12 = tpu.dynamic_rotate %6 by %c31_i32_2 dim 1 : vector<16x32xf32>, i32 -> vector<16x32xf32>
    %cst_3 = arith.constant 0.000000e+00 : f32
    %13 = vector.shape_cast %4 : vector<1x32xi1> to vector<1x32xi1>
    %14 = vector.broadcast %13 : vector<1x32xi1> to vector<16x32xi1>
    %15 = vector.broadcast %cst_3 : f32 to vector<16x32xf32>
    %16 = arith.select %14, %15, %12 : vector<16x32xi1>, vector<16x32xf32>
    %c0_4 = arith.constant 0 : index
    %c0_5 = arith.constant 0 : index
    %c0_6 = arith.constant 0 : index
    %17 = vector.load %arg2[%c0_4, %c0_5, %c0_6] : memref<3x32x16xf32, #tpu.memory_space<vmem>>, vector<1x32x16xf32>
    %18 = vector.shape_cast %17 : vector<1x32x16xf32> to vector<32x16xf32>
    %cst_7 = arith.constant dense<0.000000e+00> : vector<32x32xf32>
    %19 = tpu.matmul %18, %11, %cst_7 {dimension_numbers = #tpu.dot_dimension_numbers<[1], [0], [0], [1], [0, 0, 1, 1], [], []>} : vector<32x16xf32>, vector<16x32xf32>, vector<32x32xf32> -> vector<32x32xf32>
    %c1 = arith.constant 1 : index
    %c0_8 = arith.constant 0 : index
    %c0_9 = arith.constant 0 : index
    %20 = vector.load %arg2[%c1, %c0_8, %c0_9] : memref<3x32x16xf32, #tpu.memory_space<vmem>>, vector<1x32x16xf32>
    %21 = vector.shape_cast %20 : vector<1x32x16xf32> to vector<32x16xf32>
    %cst_10 = arith.constant dense<0.000000e+00> : vector<32x32xf32>
    %22 = tpu.matmul %21, %6, %cst_10 {dimension_numbers = #tpu.dot_dimension_numbers<[1], [0], [0], [1], [0, 0, 1, 1], [], []>} : vector<32x16xf32>, vector<16x32xf32>, vector<32x32xf32> -> vector<32x32xf32>
    %23 = arith.addf %19, %22 : vector<32x32xf32>
    %c2 = arith.constant 2 : index
    %c0_11 = arith.constant 0 : index
    %c0_12 = arith.constant 0 : index
    %24 = vector.load %arg2[%c2, %c0_11, %c0_12] : memref<3x32x16xf32, #tpu.memory_space<vmem>>, vector<1x32x16xf32>
    %25 = vector.shape_cast %24 : vector<1x32x16xf32> to vector<32x16xf32>
    %cst_13 = arith.constant dense<0.000000e+00> : vector<32x32xf32>
    %26 = tpu.matmul %25, %16, %cst_13 {dimension_numbers = #tpu.dot_dimension_numbers<[1], [0], [0], [1], [0, 0, 1, 1], [], []>} : vector<32x16xf32>, vector<16x32xf32>, vector<32x32xf32> -> vector<32x32xf32>
    %27 = arith.addf %23, %26 : vector<32x32xf32>
    %c0_14 = arith.constant 0 : index
    %c0_15 = arith.constant 0 : index
    %28 = vector.load %arg3[%c0_14, %c0_15] : memref<32x1xf32, #tpu.memory_space<vmem>>, vector<32x1xf32>
    %29 = vector.broadcast %28 : vector<32x1xf32> to vector<32x32xf32>
    %30 = arith.addf %27, %29 : vector<32x32xf32>
    %cst_16 = arith.constant 0.000000e+00 : f32
    %cst_17 = arith.constant 6.000000e+00 : f32
    %31 = vector.broadcast %cst_16 : f32 to vector<32x32xf32>
    %32 = arith.maximumf %31, %30 : vector<32x32xf32>
    %33 = vector.broadcast %cst_17 : f32 to vector<32x32xf32>
    %34 = arith.minimumf %33, %32 : vector<32x32xf32>
    %c1_i32_18 = arith.constant 1 : i32
    %35 = tpu.dynamic_rotate %34 by %c1_i32_18 dim 1 : vector<32x32xf32>, i32 -> vector<32x32xf32>
    %cst_19 = arith.constant 0.000000e+00 : f32
    %36 = vector.shape_cast %2 : vector<1x32xi1> to vector<1x32xi1>
    %37 = vector.broadcast %36 : vector<1x32xi1> to vector<32x32xi1>
    %38 = vector.broadcast %cst_19 : f32 to vector<32x32xf32>
    %39 = arith.select %37, %38, %35 : vector<32x32xi1>, vector<32x32xf32>
    %c31_i32_20 = arith.constant 31 : i32
    %40 = tpu.dynamic_rotate %34 by %c31_i32_20 dim 1 : vector<32x32xf32>, i32 -> vector<32x32xf32>
    %cst_21 = arith.constant 0.000000e+00 : f32
    %41 = vector.shape_cast %4 : vector<1x32xi1> to vector<1x32xi1>
    %42 = vector.broadcast %41 : vector<1x32xi1> to vector<32x32xi1>
    %43 = vector.broadcast %cst_21 : f32 to vector<32x32xf32>
    %44 = arith.select %42, %43, %40 : vector<32x32xi1>, vector<32x32xf32>
    %c0_22 = arith.constant 0 : index
    %c0_23 = arith.constant 0 : index
    %c0_24 = arith.constant 0 : index
    %45 = vector.load %arg4[%c0_22, %c0_23, %c0_24] : memref<3x32x32xf32, #tpu.memory_space<vmem>>, vector<1x32x32xf32>
    %46 = vector.shape_cast %45 : vector<1x32x32xf32> to vector<32x32xf32>
    %cst_25 = arith.constant dense<0.000000e+00> : vector<32x32xf32>
    %47 = tpu.matmul %46, %39, %cst_25 {dimension_numbers = #tpu.dot_dimension_numbers<[1], [0], [0], [1], [0, 0, 1, 1], [], []>} : vector<32x32xf32>, vector<32x32xf32>, vector<32x32xf32> -> vector<32x32xf32>
    %c1_26 = arith.constant 1 : index
    %c0_27 = arith.constant 0 : index
    %c0_28 = arith.constant 0 : index
    %48 = vector.load %arg4[%c1_26, %c0_27, %c0_28] : memref<3x32x32xf32, #tpu.memory_space<vmem>>, vector<1x32x32xf32>
    %49 = vector.shape_cast %48 : vector<1x32x32xf32> to vector<32x32xf32>
    %cst_29 = arith.constant dense<0.000000e+00> : vector<32x32xf32>
    %50 = tpu.matmul %49, %34, %cst_29 {dimension_numbers = #tpu.dot_dimension_numbers<[1], [0], [0], [1], [0, 0, 1, 1], [], []>} : vector<32x32xf32>, vector<32x32xf32>, vector<32x32xf32> -> vector<32x32xf32>
    %51 = arith.addf %47, %50 : vector<32x32xf32>
    %c2_30 = arith.constant 2 : index
    %c0_31 = arith.constant 0 : index
    %c0_32 = arith.constant 0 : index
    %52 = vector.load %arg4[%c2_30, %c0_31, %c0_32] : memref<3x32x32xf32, #tpu.memory_space<vmem>>, vector<1x32x32xf32>
    %53 = vector.shape_cast %52 : vector<1x32x32xf32> to vector<32x32xf32>
    %cst_33 = arith.constant dense<0.000000e+00> : vector<32x32xf32>
    %54 = tpu.matmul %53, %44, %cst_33 {dimension_numbers = #tpu.dot_dimension_numbers<[1], [0], [0], [1], [0, 0, 1, 1], [], []>} : vector<32x32xf32>, vector<32x32xf32>, vector<32x32xf32> -> vector<32x32xf32>
    %55 = arith.addf %51, %54 : vector<32x32xf32>
    %c0_34 = arith.constant 0 : index
    %c0_35 = arith.constant 0 : index
    %56 = vector.load %arg5[%c0_34, %c0_35] : memref<32x1xf32, #tpu.memory_space<vmem>>, vector<32x1xf32>
    %57 = vector.broadcast %56 : vector<32x1xf32> to vector<32x32xf32>
    %58 = arith.addf %55, %57 : vector<32x32xf32>
    %cst_36 = arith.constant dense<0.000000e+00> : vector<32xf32>
    %59 = vector.multi_reduction <add>, %58, %cst_36 [1] : vector<32x32xf32> to vector<32xf32>
    %60 = vector.shape_cast %59 : vector<32xf32> to vector<32x1xf32>
    %cst_37 = arith.constant 3.200000e+01 : f32
    %61 = vector.broadcast %cst_37 : f32 to vector<32x1xf32>
    %62 = arith.divf %60, %61 : vector<32x1xf32>
    %c0_38 = arith.constant 0 : index
    %c0_39 = arith.constant 0 : index
    %63 = vector.load %arg8[%c0_38, %c0_39] : memref<8x32xf32, #tpu.memory_space<vmem>>, vector<8x32xf32>
    %cst_40 = arith.constant dense<0.000000e+00> : vector<8x1xf32>
    %64 = tpu.matmul %63, %62, %cst_40 {dimension_numbers = #tpu.dot_dimension_numbers<[1], [0], [0], [1], [0, 0, 1, 1], [], []>} : vector<8x32xf32>, vector<32x1xf32>, vector<8x1xf32> -> vector<8x1xf32>
    %c0_41 = arith.constant 0 : index
    %c0_42 = arith.constant 0 : index
    %65 = vector.load %arg9[%c0_41, %c0_42] : memref<8x1xf32, #tpu.memory_space<vmem>>, vector<8x1xf32>
    %66 = arith.addf %64, %65 : vector<8x1xf32>
    %cst_43 = arith.constant 0.000000e+00 : f32
    %cst_44 = arith.constant 6.000000e+00 : f32
    %67 = vector.broadcast %cst_43 : f32 to vector<8x1xf32>
    %68 = arith.maximumf %67, %66 : vector<8x1xf32>
    %69 = vector.broadcast %cst_44 : f32 to vector<8x1xf32>
    %70 = arith.minimumf %69, %68 : vector<8x1xf32>
    %c0_45 = arith.constant 0 : index
    %c0_46 = arith.constant 0 : index
    %71 = vector.load %arg10[%c0_45, %c0_46] : memref<32x8xf32, #tpu.memory_space<vmem>>, vector<32x8xf32>
    %cst_47 = arith.constant dense<0.000000e+00> : vector<32x1xf32>
    %72 = tpu.matmul %71, %70, %cst_47 {dimension_numbers = #tpu.dot_dimension_numbers<[1], [0], [0], [1], [0, 0, 1, 1], [], []>} : vector<32x8xf32>, vector<8x1xf32>, vector<32x1xf32> -> vector<32x1xf32>
    %c0_48 = arith.constant 0 : index
    %c0_49 = arith.constant 0 : index
    %73 = vector.load %arg11[%c0_48, %c0_49] : memref<32x1xf32, #tpu.memory_space<vmem>>, vector<32x1xf32>
    %74 = arith.addf %72, %73 : vector<32x1xf32>
    %75 = arith.negf %74 : vector<32x1xf32>
    %76 = math.exp %75 : vector<32x1xf32>
    %cst_50 = arith.constant 1.000000e+00 : f32
    %77 = vector.broadcast %cst_50 : f32 to vector<32x1xf32>
    %78 = arith.addf %77, %76 : vector<32x1xf32>
    %79 = arith.divf %77, %78 : vector<32x1xf32>
    %c0_51 = arith.constant 0 : index
    %c0_52 = arith.constant 0 : index
    %80 = vector.load %arg6[%c0_51, %c0_52] : memref<32x16xf32, #tpu.memory_space<vmem>>, vector<32x16xf32>
    %cst_53 = arith.constant dense<0.000000e+00> : vector<32x32xf32>
    %81 = tpu.matmul %80, %6, %cst_53 {dimension_numbers = #tpu.dot_dimension_numbers<[1], [0], [0], [1], [0, 0, 1, 1], [], []>} : vector<32x16xf32>, vector<16x32xf32>, vector<32x32xf32> -> vector<32x32xf32>
    %c0_54 = arith.constant 0 : index
    %c0_55 = arith.constant 0 : index
    %82 = vector.load %arg7[%c0_54, %c0_55] : memref<32x1xf32, #tpu.memory_space<vmem>>, vector<32x1xf32>
    %83 = vector.broadcast %82 : vector<32x1xf32> to vector<32x32xf32>
    %84 = arith.addf %81, %83 : vector<32x32xf32>
    %85 = vector.broadcast %79 : vector<32x1xf32> to vector<32x32xf32>
    %86 = arith.mulf %58, %85 : vector<32x32xf32>
    %87 = arith.addf %86, %84 : vector<32x32xf32>
    %cst_56 = arith.constant 0.000000e+00 : f32
    %cst_57 = arith.constant 6.000000e+00 : f32
    %88 = vector.broadcast %cst_56 : f32 to vector<32x32xf32>
    %89 = arith.maximumf %88, %87 : vector<32x32xf32>
    %90 = vector.broadcast %cst_57 : f32 to vector<32x32xf32>
    %91 = arith.minimumf %90, %89 : vector<32x32xf32>
    %c0_58 = arith.constant 0 : index
    %c0_59 = arith.constant 0 : index
    %c0_60 = arith.constant 0 : index
    %92 = vector.load %arg12[%c0_58, %c0_59, %c0_60] : memref<1x32x32xf32, #tpu.memory_space<vmem>>, vector<1x32x32xf32>
    %93 = vector.shape_cast %92 : vector<1x32x32xf32> to vector<32x32xf32>
    %94 = vector.shape_cast %91 : vector<32x32xf32> to vector<1x32x32xf32>
    tpu.vector_store %arg12[%c0_58, %c0_59, %c0_60], %94 {strides = array<i32>} : memref<1x32x32xf32, #tpu.memory_space<vmem>>, vector<1x32x32xf32>,
    return
  }
  func.func @transform_0(%arg0: i32) -> (i32, i32, i32) {
    %c0_i32 = arith.constant 0 : i32
    %c0_i32_0 = arith.constant 0 : i32
    %c0_i32_1 = arith.constant 0 : i32
    return %arg0, %c0_i32, %c0_i32_0 : i32, i32, i32
  }
  func.func @transform_1(%arg0: i32) -> (i32, i32, i32) {
    %c0_i32 = arith.constant 0 : i32
    %c0_i32_0 = arith.constant 0 : i32
    %c0_i32_1 = arith.constant 0 : i32
    %c0_i32_2 = arith.constant 0 : i32
    return %c0_i32, %c0_i32_0, %c0_i32_1 : i32, i32, i32
  }
  func.func @transform_2(%arg0: i32) -> (i32, i32) {
    %c0_i32 = arith.constant 0 : i32
    %c0_i32_0 = arith.constant 0 : i32
    %c0_i32_1 = arith.constant 0 : i32
    return %c0_i32, %c0_i32_0 : i32, i32
  }
  func.func @transform_3(%arg0: i32) -> (i32, i32, i32) {
    %c0_i32 = arith.constant 0 : i32
    %c0_i32_0 = arith.constant 0 : i32
    %c0_i32_1 = arith.constant 0 : i32
    %c0_i32_2 = arith.constant 0 : i32
    return %c0_i32, %c0_i32_0, %c0_i32_1 : i32, i32, i32
  }
  func.func @transform_4(%arg0: i32) -> (i32, i32) {
    %c0_i32 = arith.constant 0 : i32
    %c0_i32_0 = arith.constant 0 : i32
    %c0_i32_1 = arith.constant 0 : i32
    return %c0_i32, %c0_i32_0 : i32, i32
  }
  func.func @transform_5(%arg0: i32) -> (i32, i32) {
    %c0_i32 = arith.constant 0 : i32
    %c0_i32_0 = arith.constant 0 : i32
    %c0_i32_1 = arith.constant 0 : i32
    return %c0_i32, %c0_i32_0 : i32, i32
  }
  func.func @transform_6(%arg0: i32) -> (i32, i32) {
    %c0_i32 = arith.constant 0 : i32
    %c0_i32_0 = arith.constant 0 : i32
    %c0_i32_1 = arith.constant 0 : i32
    return %c0_i32, %c0_i32_0 : i32, i32
  }
  func.func @transform_7(%arg0: i32) -> (i32, i32) {
    %c0_i32 = arith.constant 0 : i32
    %c0_i32_0 = arith.constant 0 : i32
    %c0_i32_1 = arith.constant 0 : i32
    return %c0_i32, %c0_i32_0 : i32, i32
  }
  func.func @transform_8(%arg0: i32) -> (i32, i32) {
    %c0_i32 = arith.constant 0 : i32
    %c0_i32_0 = arith.constant 0 : i32
    %c0_i32_1 = arith.constant 0 : i32
    return %c0_i32, %c0_i32_0 : i32, i32
  }
  func.func @transform_9(%arg0: i32) -> (i32, i32) {
    %c0_i32 = arith.constant 0 : i32
    %c0_i32_0 = arith.constant 0 : i32
    %c0_i32_1 = arith.constant 0 : i32
    return %c0_i32, %c0_i32_0 : i32, i32
  }
  func.func @transform_10(%arg0: i32) -> (i32, i32) {
    %c0_i32 = arith.constant 0 : i32
    %c0_i32_0 = arith.constant 0 : i32
    %c0_i32_1 = arith.constant 0 : i32
    return %c0_i32, %c0_i32_0 : i32, i32
  }
  func.func @transform_11(%arg0: i32) -> (i32, i32, i32) {
    %c0_i32 = arith.constant 0 : i32
    %c0_i32_0 = arith.constant 0 : i32
    %c0_i32_1 = arith.constant 0 : i32
    return %arg0, %c0_i32, %c0_i32_0 : i32, i32, i32
  }
}

</mosaic_0001>

<llo_original>
// kernel: tpu_custom_call.1
$region0: #{tpu_custom_call.1}
  #allocation0 [shape = 'u32[]', space=smem, size = 0x4, offset = 0x4, fixed_abs, tag = 'smem constant byte address 0x4 - core index']
  #allocation1 [shape = 'u32[72,128]{1,0:T(1,128)}', space=vmem, size = 0x9000, scoped, tag = 'internal scratch']
  %s0 = inlined_call_operand.vmem [shape: f32[4,16,32], index: 0, kind: input, shape index: {}]
  %s1 = inlined_call_operand.vmem [shape: f32[3,32,16], index: 1, kind: input, shape index: {}]
  %s2 = inlined_call_operand.vmem [shape: f32[32,1], index: 2, kind: input, shape index: {}]
  %s3 = inlined_call_operand.vmem [shape: f32[3,32,32], index: 3, kind: input, shape index: {}]
  %s4 = inlined_call_operand.vmem [shape: f32[32,1], index: 4, kind: input, shape index: {}]
  %s5 = inlined_call_operand.vmem [shape: f32[32,16], index: 5, kind: input, shape index: {}]
  %s6 = inlined_call_operand.vmem [shape: f32[32,1], index: 6, kind: input, shape index: {}]
  %s7 = inlined_call_operand.vmem [shape: f32[8,32], index: 7, kind: input, shape index: {}]
  %s8 = inlined_call_operand.vmem [shape: f32[8,1], index: 8, kind: input, shape index: {}]
  %s9 = inlined_call_operand.vmem [shape: f32[32,8], index: 9, kind: input, shape index: {}]
  %s10 = inlined_call_operand.vmem [shape: f32[32,1], index: 10, kind: input, shape index: {}]
  %s11 = inlined_call_operand.hbm [shape: f32[4,32,32], index: 11, kind: output, shape index: {}]
  %s12 = sld [smem:[#allocation0]]
  $region77: #{tpu_custom_call.1} parent=0
    _
  %s14 = ssub.s32 1, %s12
  %s15 = scalar_select 0, %s14, %s12
  $region1: #{tpu_custom_call.1} parent=0
    #allocation2 [shape = 'u8[32768]{0}', space=vmem, size = 0x8000, scoped, tag = 'output window, operand 0']
    #allocation3 [shape = 's32[2]{0}', space=sflag, size = 0x8, scoped, tag = 'scoped memory for tpu_custom_call.1']
    %16 = vsyncpa [#allocation3], 0
    %s17 = scalar_lea.sflag [#allocation3], 1
    %18 = vsyncpa %s17, 0
    loop: start=0, step=1, limit=6
    $region2: #{tpu_custom_call.1} parent=1 // loop_pre_header
      _
    $region3: #{tpu_custom_call.1} parent=1 // loop_header
      %s20 = sphi 0, %s24
      %p21 = scmp.ge.s32.totalorder %s20, 6
      %s30 = sphi 0, %s32
      %s33 = sphi 0, %s30
      %s34 = sphi 0, %s33
      %s50 = sphi 0, %s34
      %s54 = sphi 0, %s54
      %s56 = sphi 0, %s54
      %s57 = sphi 0, %s56
      %s71 = sphi 0, %s57
      %s75 = sphi 0, %s75
      %s77 = sphi 0, %s75
      %s78 = sphi 0, %s77
      %s92 = sphi 0, %s78
      %s96 = sphi 0, %s96
      %s98 = sphi 0, %s96
      %s99 = sphi 0, %s98
      %s113 = sphi 0, %s99
      %s117 = sphi 0, %s117
      %s119 = sphi 0, %s117
      %s120 = sphi 0, %s119
      %s134 = sphi 0, %s120
      %s138 = sphi 0, %s138
      %s140 = sphi 0, %s138
      %s141 = sphi 0, %s140
      %s155 = sphi 0, %s141
      %s159 = sphi 0, %s159
      %s161 = sphi 0, %s159
      %s162 = sphi 0, %s161
      %s176 = sphi 0, %s162
      %s180 = sphi 0, %s180
      %s182 = sphi 0, %s180
      %s183 = sphi 0, %s182
      %s197 = sphi 0, %s183
      %s201 = sphi 0, %s201
      %s203 = sphi 0, %s201
      %s204 = sphi 0, %s203
      %s218 = sphi 0, %s204
      %s222 = sphi 0, %s222
      %s224 = sphi 0, %s222
      %s225 = sphi 0, %s224
      %s239 = sphi 0, %s225
      %s243 = sphi 0, %s243
      %s245 = sphi 0, %s243
      %s246 = sphi 0, %s245
      %s260 = sphi 0, %s246
      %s266 = sphi 0, %s268
      %s269 = sphi 0, %s266
      %s270 = sphi 0, %s269
      %s286 = sphi 0, %s270
    $region4: #{tpu_custom_call.1} parent=1 // loop_header_branch
      %23 = sbr.rel (%p21) target = $region8
    $region5: #{tpu_custom_call.1} parent=1 // loop_body
      %s25 = ssub.s32 %s20, 1
      %s26 = ssub.s32 %s20, 2
      %s27 = sadd.s32 %s20, 1
      %s28 = ssub.s32 %s20, %s27
      %p29 = scmp.eq.s32.totalorder %s28, 0
      %s31 = sadd.s32 %s30, 1
      %s32 = scalar_select %p29, %s30, %s31
      %p35 = pneg %p29
      %p36 = scmp.eq.s32.totalorder %s20, 3
      %p37 = por %p35, %p36
      %p38 = scmp.ne.s32.totalorder %s30, %s33
      %p39 = scmp.eq.s32.totalorder %s20, 0
      %p40 = por %p38, %p39
      %p41 = scmp.ne.s32.totalorder %s30, %s33
      %p42 = scmp.eq.s32.totalorder %s25, 3
      %p43 = por %p41, %p42
      %p44 = scmp.ne.s32.totalorder %s33, %s34
      %p45 = scmp.eq.s32.totalorder %s25, 0
      %p46 = por %p44, %p45
      %p47 = scmp.ne.s32.totalorder %s33, %s34
      %p48 = scmp.eq.s32.totalorder %s26, 3
      %p49 = por %p47, %p48
      %p51 = scmp.ne.s32.totalorder %s34, %s50
      %p52 = scmp.eq.s32.totalorder %s26, 0
      %p53 = por %p51, %p52
      %s55 = sadd.s32 %s54, 1
      %p58 = scmp.eq.s32.totalorder %s20, 3
      %p59 = scmp.ne.s32.totalorder %s54, %s56
      %p60 = scmp.eq.s32.totalorder %s20, 0
      %p61 = por %p59, %p60
      %p62 = scmp.ne.s32.totalorder %s54, %s56
      %p63 = scmp.eq.s32.totalorder %s25, 3
      %p64 = por %p62, %p63
      %p65 = scmp.ne.s32.totalorder %s56, %s57
      %p66 = scmp.eq.s32.totalorder %s25, 0
      %p67 = por %p65, %p66
      %p68 = scmp.ne.s32.totalorder %s56, %s57
      %p69 = scmp.eq.s32.totalorder %s26, 3
      %p70 = por %p68, %p69
      %p72 = scmp.ne.s32.totalorder %s57, %s71
      %p73 = scmp.eq.s32.totalorder %s26, 0
      %p74 = por %p72, %p73
      %s76 = sadd.s32 %s75, 1
      %p79 = scmp.eq.s32.totalorder %s20, 3
      %p80 = scmp.ne.s32.totalorder %s75, %s77
      %p81 = scmp.eq.s32.totalorder %s20, 0
      %p82 = por %p80, %p81
      %p83 = scmp.ne.s32.totalorder %s75, %s77
      %p84 = scmp.eq.s32.totalorder %s25, 3
      %p85 = por %p83, %p84
      %p86 = scmp.ne.s32.totalorder %s77, %s78
      %p87 = scmp.eq.s32.totalorder %s25, 0
      %p88 = por %p86, %p87
      %p89 = scmp.ne.s32.totalorder %s77, %s78
      %p90 = scmp.eq.s32.totalorder %s26, 3
      %p91 = por %p89, %p90
      %p93 = scmp.ne.s32.totalorder %s78, %s92
      %p94 = scmp.eq.s32.totalorder %s26, 0
      %p95 = por %p93, %p94
      %s97 = sadd.s32 %s96, 1
      %p100 = scmp.eq.s32.totalorder %s20, 3
      %p101 = scmp.ne.s32.totalorder %s96, %s98
      %p102 = scmp.eq.s32.totalorder %s20, 0
      %p103 = por %p101, %p102
      %p104 = scmp.ne.s32.totalorder %s96, %s98
      %p105 = scmp.eq.s32.totalorder %s25, 3
      %p106 = por %p104, %p105
      %p107 = scmp.ne.s32.totalorder %s98, %s99
      %p108 = scmp.eq.s32.totalorder %s25, 0
      %p109 = por %p107, %p108
      %p110 = scmp.ne.s32.totalorder %s98, %s99
      %p111 = scmp.eq.s32.totalorder %s26, 3
      %p112 = por %p110, %p111
      %p114 = scmp.ne.s32.totalorder %s99, %s113
      %p115 = scmp.eq.s32.totalorder %s26, 0
      %p116 = por %p114, %p115
      %s118 = sadd.s32 %s117, 1
      %p121 = scmp.eq.s32.totalorder %s20, 3
      %p122 = scmp.ne.s32.totalorder %s117, %s119
      %p123 = scmp.eq.s32.totalorder %s20, 0
      %p124 = por %p122, %p123
      %p125 = scmp.ne.s32.totalorder %s117, %s119
      %p126 = scmp.eq.s32.totalorder %s25, 3
      %p127 = por %p125, %p126
      %p128 = scmp.ne.s32.totalorder %s119, %s120
      %p129 = scmp.eq.s32.totalorder %s25, 0
      %p130 = por %p128, %p129
      %p131 = scmp.ne.s32.totalorder %s119, %s120
      %p132 = scmp.eq.s32.totalorder %s26, 3
      %p133 = por %p131, %p132
      %p135 = scmp.ne.s32.totalorder %s120, %s134
      %p136 = scmp.eq.s32.totalorder %s26, 0
      %p137 = por %p135, %p136
      %s139 = sadd.s32 %s138, 1
      %p142 = scmp.eq.s32.totalorder %s20, 3
      %p143 = scmp.ne.s32.totalorder %s138, %s140
      %p144 = scmp.eq.s32.totalorder %s20, 0
      %p145 = por %p143, %p144
      %p146 = scmp.ne.s32.totalorder %s138, %s140
      %p147 = scmp.eq.s32.totalorder %s25, 3
      %p148 = por %p146, %p147
      %p149 = scmp.ne.s32.totalorder %s140, %s141
      %p150 = scmp.eq.s32.totalorder %s25, 0
      %p151 = por %p149, %p150
      %p152 = scmp.ne.s32.totalorder %s140, %s141
      %p153 = scmp.eq.s32.totalorder %s26, 3
      %p154 = por %p152, %p153
      %p156 = scmp.ne.s32.totalorder %s141, %s155
      %p157 = scmp.eq.s32.totalorder %s26, 0
      %p158 = por %p156, %p157
      %s160 = sadd.s32 %s159, 1
      %p163 = scmp.eq.s32.totalorder %s20, 3
      %p164 = scmp.ne.s32.totalorder %s159, %s161
      %p165 = scmp.eq.s32.totalorder %s20, 0
      %p166 = por %p164, %p165
      %p167 = scmp.ne.s32.totalorder %s159, %s161
      %p168 = scmp.eq.s32.totalorder %s25, 3
      %p169 = por %p167, %p168
      %p170 = scmp.ne.s32.totalorder %s161, %s162
      %p171 = scmp.eq.s32.totalorder %s25, 0
      %p172 = por %p170, %p171
      %p173 = scmp.ne.s32.totalorder %s161, %s162
      %p174 = scmp.eq.s32.totalorder %s26, 3
      %p175 = por %p173, %p174
      %p177 = scmp.ne.s32.totalorder %s162, %s176
      %p178 = scmp.eq.s32.totalorder %s26, 0
      %p179 = por %p177, %p178
      %s181 = sadd.s32 %s180, 1
      %p184 = scmp.eq.s32.totalorder %s20, 3
      %p185 = scmp.ne.s32.totalorder %s180, %s182
      %p186 = scmp.eq.s32.totalorder %s20, 0
      %p187 = por %p185, %p186
      %p188 = scmp.ne.s32.totalorder %s180, %s182
      %p189 = scmp.eq.s32.totalorder %s25, 3
      %p190 = por %p188, %p189
      %p191 = scmp.ne.s32.totalorder %s182, %s183
      %p192 = scmp.eq.s32.totalorder %s25, 0
      %p193 = por %p191, %p192
      %p194 = scmp.ne.s32.totalorder %s182, %s183
      %p195 = scmp.eq.s32.totalorder %s26, 3
      %p196 = por %p194, %p195
      %p198 = scmp.ne.s32.totalorder %s183, %s197
      %p199 = scmp.eq.s32.totalorder %s26, 0
      %p200 = por %p198, %p199
      %s202 = sadd.s32 %s201, 1
      %p205 = scmp.eq.s32.totalorder %s20, 3
      %p206 = scmp.ne.s32.totalorder %s201, %s203
      %p207 = scmp.eq.s32.totalorder %s20, 0
      %p208 = por %p206, %p207
      %p209 = scmp.ne.s32.totalorder %s201, %s203
      %p210 = scmp.eq.s32.totalorder %s25, 3
      %p211 = por %p209, %p210
      %p212 = scmp.ne.s32.totalorder %s203, %s204
      %p213 = scmp.eq.s32.totalorder %s25, 0
      %p214 = por %p212, %p213
      %p215 = scmp.ne.s32.totalorder %s203, %s204
      %p216 = scmp.eq.s32.totalorder %s26, 3
      %p217 = por %p215, %p216
      %p219 = scmp.ne.s32.totalorder %s204, %s218
      %p220 = scmp.eq.s32.totalorder %s26, 0
      %p221 = por %p219, %p220
      %s223 = sadd.s32 %s222, 1
      %p226 = scmp.eq.s32.totalorder %s20, 3
      %p227 = scmp.ne.s32.totalorder %s222, %s224
      %p228 = scmp.eq.s32.totalorder %s20, 0
      %p229 = por %p227, %p228
      %p230 = scmp.ne.s32.totalorder %s222, %s224
      %p231 = scmp.eq.s32.totalorder %s25, 3
      %p232 = por %p230, %p231
      %p233 = scmp.ne.s32.totalorder %s224, %s225
      %p234 = scmp.eq.s32.totalorder %s25, 0
      %p235 = por %p233, %p234
      %p236 = scmp.ne.s32.totalorder %s224, %s225
      %p237 = scmp.eq.s32.totalorder %s26, 3
      %p238 = por %p236, %p237
      %p240 = scmp.ne.s32.totalorder %s225, %s239
      %p241 = scmp.eq.s32.totalorder %s26, 0
      %p242 = por %p240, %p241
      %s244 = sadd.s32 %s243, 1
      %p247 = scmp.eq.s32.totalorder %s20, 3
      %p248 = scmp.ne.s32.totalorder %s243, %s245
      %p249 = scmp.eq.s32.totalorder %s20, 0
      %p250 = por %p248, %p249
      %p251 = scmp.ne.s32.totalorder %s243, %s245
      %p252 = scmp.eq.s32.totalorder %s25, 3
      %p253 = por %p251, %p252
      %p254 = scmp.ne.s32.totalorder %s245, %s246
      %p255 = scmp.eq.s32.totalorder %s25, 0
      %p256 = por %p254, %p255
      %p257 = scmp.ne.s32.totalorder %s245, %s246
      %p258 = scmp.eq.s32.totalorder %s26, 3
      %p259 = por %p257, %p258
      %p261 = scmp.ne.s32.totalorder %s246, %s260
      %p262 = scmp.eq.s32.totalorder %s26, 0
      %p263 = por %p261, %p262
      %s264 = ssub.s32 %s20, %s27
      %p265 = scmp.eq.s32.totalorder %s264, 0
      %s267 = sadd.s32 %s266, 1
      %s268 = scalar_select %p265, %s266, %s267
      %p271 = pneg %p265
      %p272 = scmp.eq.s32.totalorder %s20, 3
      %p273 = por %p271, %p272
      %p274 = scmp.ne.s32.totalorder %s266, %s269
      %p275 = scmp.eq.s32.totalorder %s20, 0
      %p276 = por %p274, %p275
      %p277 = scmp.ne.s32.totalorder %s266, %s269
      %p278 = scmp.eq.s32.totalorder %s25, 3
      %p279 = por %p277, %p278
      %p280 = scmp.ne.s32.totalorder %s269, %s270
      %p281 = scmp.eq.s32.totalorder %s25, 0
      %p282 = por %p280, %p281
      %p283 = scmp.ne.s32.totalorder %s269, %s270
      %p284 = scmp.eq.s32.totalorder %s26, 3
      %p285 = por %p283, %p284
      %p287 = scmp.ne.s32.totalorder %s270, %s286
      %p288 = scmp.eq.s32.totalorder %s26, 0
      %p289 = por %p287, %p288
      %p290 = scmp.le.s32.totalorder 1, %s20
      %p291 = scmp.lt.s32.totalorder %s20, 5
      %p292 = pnand %p290, %p291
      %p293 = pneg %p292
      // Predicated region
      $region9: #{tpu_custom_call.1} parent=5 // pred_check
        _
      $region10: #{tpu_custom_call.1} parent=5 // pred_check_branch
        %295 = sbr.rel (%p292) target = $region12
      $region11: #{tpu_custom_call.1} parent=5 // pred_region
        %s296 = ssub.s32 %s20, 1
        // Predicated region
        $region13: #{tpu_custom_call.1} parent=11 // pred_check
          %p297 = pneg %p67
        $region14: #{tpu_custom_call.1} parent=11 // pred_check_branch
          %299 = sbr.rel (%p297) target = $region16
        $region15: #{tpu_custom_call.1} parent=11 // pred_region
          _
        $region16: #{tpu_custom_call.1} parent=11 // pred_fallthru
          _
        // Predicated region
        $region17: #{tpu_custom_call.1} parent=11 // pred_check
          %p300 = pneg %p88
        $region18: #{tpu_custom_call.1} parent=11 // pred_check_branch
          %302 = sbr.rel (%p300) target = $region20
        $region19: #{tpu_custom_call.1} parent=11 // pred_region
          _
        $region20: #{tpu_custom_call.1} parent=11 // pred_fallthru
          _
        // Predicated region
        $region21: #{tpu_custom_call.1} parent=11 // pred_check
          %p303 = pneg %p109
        $region22: #{tpu_custom_call.1} parent=11 // pred_check_branch
          %305 = sbr.rel (%p303) target = $region24
        $region23: #{tpu_custom_call.1} parent=11 // pred_region
          _
        $region24: #{tpu_custom_call.1} parent=11 // pred_fallthru
          _
        // Predicated region
        $region25: #{tpu_custom_call.1} parent=11 // pred_check
          %p306 = pneg %p130
        $region26: #{tpu_custom_call.1} parent=11 // pred_check_branch
          %308 = sbr.rel (%p306) target = $region28
        $region27: #{tpu_custom_call.1} parent=11 // pred_region
          _
        $region28: #{tpu_custom_call.1} parent=11 // pred_fallthru
          _
        // Predicated region
        $region29: #{tpu_custom_call.1} parent=11 // pred_check
          %p309 = pneg %p151
        $region30: #{tpu_custom_call.1} parent=11 // pred_check_branch
          %311 = sbr.rel (%p309) target = $region32
        $region31: #{tpu_custom_call.1} parent=11 // pred_region
          _
        $region32: #{tpu_custom_call.1} parent=11 // pred_fallthru
          _
        // Predicated region
        $region33: #{tpu_custom_call.1} parent=11 // pred_check
          %p312 = pneg %p172
        $region34: #{tpu_custom_call.1} parent=11 // pred_check_branch
          %314 = sbr.rel (%p312) target = $region36
        $region35: #{tpu_custom_call.1} parent=11 // pred_region
          _
        $region36: #{tpu_custom_call.1} parent=11 // pred_fallthru
          _
        // Predicated region
        $region37: #{tpu_custom_call.1} parent=11 // pred_check
          %p315 = pneg %p193
        $region38: #{tpu_custom_call.1} parent=11 // pred_check_branch
          %317 = sbr.rel (%p315) target = $region40
        $region39: #{tpu_custom_call.1} parent=11 // pred_region
          _
        $region40: #{tpu_custom_call.1} parent=11 // pred_fallthru
          _
        // Predicated region
        $region41: #{tpu_custom_call.1} parent=11 // pred_check
          %p318 = pneg %p214
        $region42: #{tpu_custom_call.1} parent=11 // pred_check_branch
          %320 = sbr.rel (%p318) target = $region44
        $region43: #{tpu_custom_call.1} parent=11 // pred_region
          _
        $region44: #{tpu_custom_call.1} parent=11 // pred_fallthru
          _
        // Predicated region
        $region45: #{tpu_custom_call.1} parent=11 // pred_check
          %p321 = pneg %p235
        $region46: #{tpu_custom_call.1} parent=11 // pred_check_branch
          %323 = sbr.rel (%p321) target = $region48
        $region47: #{tpu_custom_call.1} parent=11 // pred_region
          _
        $region48: #{tpu_custom_call.1} parent=11 // pred_fallthru
          _
        // Predicated region
        $region49: #{tpu_custom_call.1} parent=11 // pred_check
          %p324 = pneg %p256
        $region50: #{tpu_custom_call.1} parent=11 // pred_check_branch
          %326 = sbr.rel (%p324) target = $region52
        $region51: #{tpu_custom_call.1} parent=11 // pred_region
          _
        $region52: #{tpu_custom_call.1} parent=11 // pred_fallthru
          _
      $region12: #{tpu_custom_call.1} parent=5 // pred_fallthru
        _
      %p327 = scmp.lt.s32.totalorder %s20, 4
      // Predicated region
      $region53: #{tpu_custom_call.1} parent=5 // pred_check
        %p328 = pneg %p327
      $region54: #{tpu_custom_call.1} parent=5 // pred_check_branch
        %330 = sbr.rel (%p328) target = $region56
      $region55: #{tpu_custom_call.1} parent=5 // pred_region
        // Predicated region
        $region57: #{tpu_custom_call.1} parent=55 // pred_check
          %p331 = pneg %p40
        $region58: #{tpu_custom_call.1} parent=55 // pred_check_branch
          %333 = sbr.rel (%p331) target = $region60
        $region59: #{tpu_custom_call.1} parent=55 // pred_region
          %p334 = scmp.lt.s32.totalorder %s20, 3
          %s335 = scalar_select %p334, %s20, 3
          %s336 = smul.addr %s335, 2
          %s337 = smul.addr %s336, 8
          %s338 = scalar_lea.vmem %s0, %s337
        $region60: #{tpu_custom_call.1} parent=55 // pred_fallthru
          _
      $region56: #{tpu_custom_call.1} parent=5 // pred_fallthru
        _
      %p339 = scmp.le.s32.totalorder 1, %s20
      %p340 = scmp.lt.s32.totalorder %s20, 5
      %p341 = pnand %p339, %p340
      %p342 = pneg %p341
      // Predicated region
      $region61: #{tpu_custom_call.1} parent=5 // pred_check
        _
      $region62: #{tpu_custom_call.1} parent=5 // pred_check_branch
        %344 = sbr.rel (%p341) target = $region64
      $region63: #{tpu_custom_call.1} parent=5 // pred_region
        %s345 = ssub.s32 %s20, 1
        %p346 = scmp.lt.s32.totalorder %s25, 3
        %s347 = scalar_select %p346, %s25, 3
        %s348 = smul.addr %s347, 2
        %s349 = smul.addr %s348, 8
        %s350 = scalar_lea.vmem %s0, %s349
        %p351 = pneg %p46
        %p352 = pneg %p43
        %p353 = pneg %p67
        %p354 = pneg %p64
        %p355 = pneg %p88
        %p356 = pneg %p85
        %p357 = pneg %p109
        %p358 = pneg %p106
        %p359 = pneg %p130
        %p360 = pneg %p127
        %p361 = pneg %p151
        %p362 = pneg %p148
        %p363 = pneg %p172
        %p364 = pneg %p169
        %p365 = pneg %p193
        %p366 = pneg %p190
        %p367 = pneg %p214
        %p368 = pneg %p211
        %p369 = pneg %p235
        %p370 = pneg %p232
        %p371 = pneg %p256
        %p372 = pneg %p253
        %p373 = pneg %p282
        %p374 = pneg %p279
        %s375 = sand.u32 %s269, 1
        %s376 = scalar_lea.sflag [#allocation3], %s375
        %s377 = sand.u32 %s269, 1
        %s378 = smul.addr %s377, 32
        %s379 = scalar_lea.vmem [#allocation2], %s378
        %p380 = scmp.lt.s32.totalorder %s25, 3
        %s381 = scalar_select %p380, %s25, 3
        %s382 = smul.addr %s381, 2
        %s383 = smul.addr %s382, 8
        %s384 = scalar_lea.vmem %s0, %s383
        %v385 = vlaneseq
        %v386 = vand.u32 %v385, 127
        %vm387 = vcmp.eq.s32.totalorder %v386, 0
        %vm388 = vcmp.eq.s32.totalorder %v386, 31
        %v389 = vld [vmem:[%s384] sm:$0xff]
        %v390 = vld [vmem:[%s384 + $0x8] sm:$0xff]
        %vm391 = vcmask 1047808
        %392 = vrot.lane.b32.xlu0 %v389, 32
        %v393 = vpop.permute.xlu0 %392
        %v394 = vsel %vm391, %v393, %v389
        %395 = vrot.lane.b32.xlu0 %v390, 32
        %v396 = vpop.permute.xlu0 %395
        %v397 = vsel %vm391, %v396, %v390
        %398 = vrot.lane.b32.xlu0 %v394, 32
        %v399 = vpop.permute.xlu0 %398
        %400 = vrot.lane.b32.xlu0 %v397, 32
        %v401 = vpop.permute.xlu0 %400
        %v402 = vsel %vm391, %v399, %v389
        %v403 = vsel %vm391, %v401, %v390
        %v404 = vsel %vm387, 1, 0
        %vm405 = vcmp.eq.s32.totalorder %v404, 1
        %408 = vrot.lane.b32.xlu0 %v402, 97
        %v409 = vpop.permute.xlu0 %408
        %410 = vrot.lane.b32.xlu0 %v403, 97
        %v411 = vpop.permute.xlu0 %410
        %v414 = vsel %vm405, 0.0, %v409
        %v415 = vsel %vm405, 0.0, %v411
        %v416 = vsel %vm388, 1, 0
        %vm417 = vcmp.eq.s32.totalorder %v416, 1
        %418 = vrot.lane.b32.xlu0 %v402, 127
        %v419 = vpop.permute.xlu0 %418
        %420 = vrot.lane.b32.xlu0 %v403, 127
        %v421 = vpop.permute.xlu0 %420
        %v424 = vsel %vm417, 0.0, %v419
        %v425 = vsel %vm417, 0.0, %v421
        %v426 = vld [vmem:[%s1] sm:$0xff]
        %v427 = vld [vmem:[%s1 + $0x8] sm:$0xff]
        %v428 = vld [vmem:[%s1 + $0x10] sm:$0xff]
        %v429 = vld [vmem:[%s1 + $0x18] sm:$0xff]
        %s430 = scalar_lea.vmem %s1, 32
        %v431 = vld [vmem:[%s430] sm:$0xff]
        %v432 = vld [vmem:[%s430 + $0x8] sm:$0xff]
        %v433 = vld [vmem:[%s430 + $0x10] sm:$0xff]
        %v434 = vld [vmem:[%s430 + $0x18] sm:$0xff]
        %vm435 = vcmask 130048
        %v437 = vsel %vm435, %v431, 0
        %v440 = vsel %vm435, %v432, 0
        %v443 = vsel %vm435, %v433, 0
        %v446 = vsel %vm435, %v434, 0
        %448 = vmatpush.msra.mxu0 0.0
        %449 = vmatpush.msra.mxu0 0.0
        %450 = vmatpush.msra.mxu0 0.0
        %451 = vmatpush.msra.mxu0 0.0
        %452 = vmatpush.msra.mxu0 0.0
        %453 = vmatpush.msra.mxu0 0.0
        %454 = vmatpush.msra.mxu0 0.0
        %455 = vmatpush.msra.mxu0 0.0
        %456 = vmatpush.msra.mxu0 0.0
        %457 = vmatpush.msra.mxu0 0.0
        %458 = vmatpush.msra.mxu0 0.0
        %459 = vmatpush.msra.mxu0 0.0
        %460 = vmatpush.msra.mxu0 0.0
        %461 = vmatpush.msra.mxu0 0.0
        %462 = vmatpush.msra.mxu0 %v390
        %463 = vmatpush.msra.mxu0 %v389
        %464 = vmatmul.f32.gmra.mxu0 %v437
        %v465 = vpop.f32.mrf.mxu0
        %v466 = vadd.f32 0.0, %v465
        %467 = vmatmul.f32.gmra.mxu0 %v440
        %v468 = vpop.f32.mrf.mxu0
        %v469 = vadd.f32 0.0, %v468
        %470 = vmatmul.f32.gmra.mxu0 %v443
        %v471 = vpop.f32.mrf.mxu0
        %v472 = vadd.f32 0.0, %v471
        %473 = vmatmul.f32.gmra.mxu0 %v446
        %v474 = vpop.f32.mrf.mxu0
        %v475 = vadd.f32 0.0, %v474
        %476 = vdwg.mxu0
        %v478 = vsel %vm435, %v426, 0
        %v481 = vsel %vm435, %v427, 0
        %v484 = vsel %vm435, %v428, 0
        %v487 = vsel %vm435, %v429, 0
        %489 = vmatpush.msra.mxu0 0.0
        %490 = vmatpush.msra.mxu0 0.0
        %491 = vmatpush.msra.mxu0 0.0
        %492 = vmatpush.msra.mxu0 0.0
        %493 = vmatpush.msra.mxu0 0.0
        %494 = vmatpush.msra.mxu0 0.0
        %495 = vmatpush.msra.mxu0 0.0
        %496 = vmatpush.msra.mxu0 0.0
        %497 = vmatpush.msra.mxu0 0.0
        %498 = vmatpush.msra.mxu0 0.0
        %499 = vmatpush.msra.mxu0 0.0
        %500 = vmatpush.msra.mxu0 0.0
        %501 = vmatpush.msra.mxu0 0.0
        %502 = vmatpush.msra.mxu0 0.0
        %503 = vmatpush.msra.mxu0 %v415
        %504 = vmatpush.msra.mxu0 %v414
        %505 = vmatmul.f32.gmra.mxu0 %v478
        %v506 = vpop.f32.mrf.mxu0
        %v507 = vadd.f32 %v466, %v506
        %508 = vmatmul.f32.gmra.mxu0 %v481
        %v509 = vpop.f32.mrf.mxu0
        %v510 = vadd.f32 %v469, %v509
        %511 = vmatmul.f32.gmra.mxu0 %v484
        %v512 = vpop.f32.mrf.mxu0
        %v513 = vadd.f32 %v472, %v512
        %514 = vmatmul.f32.gmra.mxu0 %v487
        %v515 = vpop.f32.mrf.mxu0
        %v516 = vadd.f32 %v475, %v515
        %517 = vdwg.mxu0
        %s518 = scalar_lea.vmem %s1, 64
        %v519 = vld [vmem:[%s518] sm:$0xff]
        %v520 = vld [vmem:[%s518 + $0x8] sm:$0xff]
        %v521 = vld [vmem:[%s518 + $0x10] sm:$0xff]
        %v522 = vld [vmem:[%s518 + $0x18] sm:$0xff]
        %v524 = vsel %vm435, %v519, 0
        %v527 = vsel %vm435, %v520, 0
        %v530 = vsel %vm435, %v521, 0
        %v533 = vsel %vm435, %v522, 0
        %535 = vmatpush.msra.mxu0 0.0
        %536 = vmatpush.msra.mxu0 0.0
        %537 = vmatpush.msra.mxu0 0.0
        %538 = vmatpush.msra.mxu0 0.0
        %539 = vmatpush.msra.mxu0 0.0
        %540 = vmatpush.msra.mxu0 0.0
        %541 = vmatpush.msra.mxu0 0.0
        %542 = vmatpush.msra.mxu0 0.0
        %543 = vmatpush.msra.mxu0 0.0
        %544 = vmatpush.msra.mxu0 0.0
        %545 = vmatpush.msra.mxu0 0.0
        %546 = vmatpush.msra.mxu0 0.0
        %547 = vmatpush.msra.mxu0 0.0
        %548 = vmatpush.msra.mxu0 0.0
        %549 = vmatpush.msra.mxu0 %v425
        %550 = vmatpush.msra.mxu0 %v424
        %551 = vmatmul.f32.gmra.mxu0 %v524
        %v552 = vpop.f32.mrf.mxu0
        %v553 = vadd.f32 0.0, %v552
        %554 = vmatmul.f32.gmra.mxu0 %v527
        %v555 = vpop.f32.mrf.mxu0
        %v556 = vadd.f32 0.0, %v555
        %557 = vmatmul.f32.gmra.mxu0 %v530
        %v558 = vpop.f32.mrf.mxu0
        %v559 = vadd.f32 0.0, %v558
        %560 = vmatmul.f32.gmra.mxu0 %v533
        %v561 = vpop.f32.mrf.mxu0
        %v562 = vadd.f32 0.0, %v561
        %563 = vdwg.mxu0
        %v564 = vadd.f32 %v507, %v553
        %v565 = vadd.f32 %v510, %v556
        %v566 = vadd.f32 %v513, %v559
        %v567 = vadd.f32 %v516, %v562
        %v568 = vld [vmem:[%s2] sm:$0xff]
        %v569 = vld [vmem:[%s2 + $0x8] sm:$0xff]
        %v570 = vld [vmem:[%s2 + $0x10] sm:$0xff]
        %v571 = vld [vmem:[%s2 + $0x18] sm:$0xff]
        %573 = vset.pattern.permute.xlu0 0
        %574 = vperm.xlu0 %573, %v568
        %v575 = vpop.permute.xlu0 %574
        %578 = vset.pattern.permute.xlu0 0
        %579 = vperm.xlu0 %578, %v569
        %v580 = vpop.permute.xlu0 %579
        %583 = vset.pattern.permute.xlu0 0
        %584 = vperm.xlu0 %583, %v570
        %v585 = vpop.permute.xlu0 %584
        %588 = vset.pattern.permute.xlu0 0
        %589 = vperm.xlu0 %588, %v571
        %v590 = vpop.permute.xlu0 %589
        %v592 = vadd.f32 %v564, %v575
        %v593 = vadd.f32 %v565, %v580
        %v594 = vadd.f32 %v566, %v585
        %v595 = vadd.f32 %v567, %v590
        %v596 = vmax.f32 %v592, 0.0
        %v597 = vmax.f32 %v593, 0.0
        %v598 = vmax.f32 %v594, 0.0
        %v599 = vmax.f32 %v595, 0.0
        %v600 = vmin.f32 %v596, 6.0
        %v601 = vmin.f32 %v597, 6.0
        %v602 = vmin.f32 %v598, 6.0
        %v603 = vmin.f32 %v599, 6.0
        %604 = vrot.lane.b32.xlu0 %v600, 32
        %v605 = vpop.permute.xlu0 %604
        %v606 = vsel %vm391, %v605, %v600
        %607 = vrot.lane.b32.xlu0 %v601, 32
        %v608 = vpop.permute.xlu0 %607
        %v609 = vsel %vm391, %v608, %v601
        %610 = vrot.lane.b32.xlu0 %v602, 32
        %v611 = vpop.permute.xlu0 %610
        %v612 = vsel %vm391, %v611, %v602
        %613 = vrot.lane.b32.xlu0 %v603, 32
        %v614 = vpop.permute.xlu0 %613
        %v615 = vsel %vm391, %v614, %v603
        %616 = vrot.lane.b32.xlu0 %v606, 32
        %v617 = vpop.permute.xlu0 %616
        %618 = vrot.lane.b32.xlu0 %v609, 32
        %v619 = vpop.permute.xlu0 %618
        %620 = vrot.lane.b32.xlu0 %v612, 32
        %v621 = vpop.permute.xlu0 %620
        %622 = vrot.lane.b32.xlu0 %v615, 32
        %v623 = vpop.permute.xlu0 %622
        %v624 = vsel %vm391, %v617, %v600
        %v625 = vsel %vm391, %v619, %v601
        %v626 = vsel %vm391, %v621, %v602
        %v627 = vsel %vm391, %v623, %v603
        %632 = vrot.lane.b32.xlu0 %v624, 97
        %v633 = vpop.permute.xlu0 %632
        %634 = vrot.lane.b32.xlu0 %v625, 97
        %v635 = vpop.permute.xlu0 %634
        %636 = vrot.lane.b32.xlu0 %v626, 97
        %v637 = vpop.permute.xlu0 %636
        %638 = vrot.lane.b32.xlu0 %v627, 97
        %v639 = vpop.permute.xlu0 %638
        %v644 = vsel %vm405, 0.0, %v633
        %v645 = vsel %vm405, 0.0, %v635
        %v646 = vsel %vm405, 0.0, %v637
        %v647 = vsel %vm405, 0.0, %v639
        %648 = vrot.lane.b32.xlu0 %v624, 127
        %v649 = vpop.permute.xlu0 %648
        %650 = vrot.lane.b32.xlu0 %v625, 127
        %v651 = vpop.permute.xlu0 %650
        %652 = vrot.lane.b32.xlu0 %v626, 127
        %v653 = vpop.permute.xlu0 %652
        %654 = vrot.lane.b32.xlu0 %v627, 127
        %v655 = vpop.permute.xlu0 %654
        %v660 = vsel %vm417, 0.0, %v649
        %v661 = vsel %vm417, 0.0, %v651
        %v662 = vsel %vm417, 0.0, %v653
        %v663 = vsel %vm417, 0.0, %v655
        %v664 = vld [vmem:[%s3] sm:$0xff]
        %v665 = vld [vmem:[%s3 + $0x8] sm:$0xff]
        %v666 = vld [vmem:[%s3 + $0x10] sm:$0xff]
        %v667 = vld [vmem:[%s3 + $0x18] sm:$0xff]
        %s668 = scalar_lea.vmem %s3, 32
        %v669 = vld [vmem:[%s668] sm:$0xff]
        %v670 = vld [vmem:[%s668 + $0x8] sm:$0xff]
        %v671 = vld [vmem:[%s668 + $0x10] sm:$0xff]
        %v672 = vld [vmem:[%s668 + $0x18] sm:$0xff]
        %vm673 = vcmask 261120
        %v675 = vsel %vm673, %v669, 0
        %v678 = vsel %vm673, %v670, 0
        %v681 = vsel %vm673, %v671, 0
        %v684 = vsel %vm673, %v672, 0
        %686 = vmatpush.msra.mxu0 0.0
        %687 = vmatpush.msra.mxu0 0.0
        %688 = vmatpush.msra.mxu0 0.0
        %689 = vmatpush.msra.mxu0 0.0
        %690 = vmatpush.msra.mxu0 0.0
        %691 = vmatpush.msra.mxu0 0.0
        %692 = vmatpush.msra.mxu0 0.0
        %693 = vmatpush.msra.mxu0 0.0
        %694 = vmatpush.msra.mxu0 0.0
        %695 = vmatpush.msra.mxu0 0.0
        %696 = vmatpush.msra.mxu0 0.0
        %697 = vmatpush.msra.mxu0 0.0
        %698 = vmatpush.msra.mxu0 %v603
        %699 = vmatpush.msra.mxu0 %v602
        %700 = vmatpush.msra.mxu0 %v601
        %701 = vmatpush.msra.mxu0 %v600
        %702 = vmatmul.f32.gmra.mxu0 %v675
        %v703 = vpop.f32.mrf.mxu0
        %v704 = vadd.f32 0.0, %v703
        %705 = vmatmul.f32.gmra.mxu0 %v678
        %v706 = vpop.f32.mrf.mxu0
        %v707 = vadd.f32 0.0, %v706
        %708 = vmatmul.f32.gmra.mxu0 %v681
        %v709 = vpop.f32.mrf.mxu0
        %v710 = vadd.f32 0.0, %v709
        %711 = vmatmul.f32.gmra.mxu0 %v684
        %v712 = vpop.f32.mrf.mxu0
        %v713 = vadd.f32 0.0, %v712
        %714 = vdwg.mxu0
        %v716 = vsel %vm673, %v664, 0
        %v719 = vsel %vm673, %v665, 0
        %v722 = vsel %vm673, %v666, 0
        %v725 = vsel %vm673, %v667, 0
        %727 = vmatpush.msra.mxu0 0.0
        %728 = vmatpush.msra.mxu0 0.0
        %729 = vmatpush.msra.mxu0 0.0
        %730 = vmatpush.msra.mxu0 0.0
        %731 = vmatpush.msra.mxu0 0.0
        %732 = vmatpush.msra.mxu0 0.0
        %733 = vmatpush.msra.mxu0 0.0
        %734 = vmatpush.msra.mxu0 0.0
        %735 = vmatpush.msra.mxu0 0.0
        %736 = vmatpush.msra.mxu0 0.0
        %737 = vmatpush.msra.mxu0 0.0
        %738 = vmatpush.msra.mxu0 0.0
        %739 = vmatpush.msra.mxu0 %v647
        %740 = vmatpush.msra.mxu0 %v646
        %741 = vmatpush.msra.mxu0 %v645
        %742 = vmatpush.msra.mxu0 %v644
        %743 = vmatmul.f32.gmra.mxu0 %v716
        %v744 = vpop.f32.mrf.mxu0
        %v745 = vadd.f32 %v704, %v744
        %746 = vmatmul.f32.gmra.mxu0 %v719
        %v747 = vpop.f32.mrf.mxu0
        %v748 = vadd.f32 %v707, %v747
        %749 = vmatmul.f32.gmra.mxu0 %v722
        %v750 = vpop.f32.mrf.mxu0
        %v751 = vadd.f32 %v710, %v750
        %752 = vmatmul.f32.gmra.mxu0 %v725
        %v753 = vpop.f32.mrf.mxu0
        %v754 = vadd.f32 %v713, %v753
        %755 = vdwg.mxu0
        %s756 = scalar_lea.vmem %s3, 64
        %v757 = vld [vmem:[%s756] sm:$0xff]
        %v758 = vld [vmem:[%s756 + $0x8] sm:$0xff]
        %v759 = vld [vmem:[%s756 + $0x10] sm:$0xff]
        %v760 = vld [vmem:[%s756 + $0x18] sm:$0xff]
        %v762 = vsel %vm673, %v757, 0
        %v765 = vsel %vm673, %v758, 0
        %v768 = vsel %vm673, %v759, 0
        %v771 = vsel %vm673, %v760, 0
        %773 = vmatpush.msra.mxu0 0.0
        %774 = vmatpush.msra.mxu0 0.0
        %775 = vmatpush.msra.mxu0 0.0
        %776 = vmatpush.msra.mxu0 0.0
        %777 = vmatpush.msra.mxu0 0.0
        %778 = vmatpush.msra.mxu0 0.0
        %779 = vmatpush.msra.mxu0 0.0
        %780 = vmatpush.msra.mxu0 0.0
        %781 = vmatpush.msra.mxu0 0.0
        %782 = vmatpush.msra.mxu0 0.0
        %783 = vmatpush.msra.mxu0 0.0
        %784 = vmatpush.msra.mxu0 0.0
        %785 = vmatpush.msra.mxu0 %v663
        %786 = vmatpush.msra.mxu0 %v662
        %787 = vmatpush.msra.mxu0 %v661
        %788 = vmatpush.msra.mxu0 %v660
        %789 = vmatmul.f32.gmra.mxu0 %v762
        %v790 = vpop.f32.mrf.mxu0
        %v791 = vadd.f32 0.0, %v790
        %792 = vmatmul.f32.gmra.mxu0 %v765
        %v793 = vpop.f32.mrf.mxu0
        %v794 = vadd.f32 0.0, %v793
        %795 = vmatmul.f32.gmra.mxu0 %v768
        %v796 = vpop.f32.mrf.mxu0
        %v797 = vadd.f32 0.0, %v796
        %798 = vmatmul.f32.gmra.mxu0 %v771
        %v799 = vpop.f32.mrf.mxu0
        %v800 = vadd.f32 0.0, %v799
        %801 = vdwg.mxu0
        %v802 = vadd.f32 %v745, %v791
        %v803 = vadd.f32 %v748, %v794
        %v804 = vadd.f32 %v751, %v797
        %v805 = vadd.f32 %v754, %v800
        %v806 = vld [vmem:[%s4] sm:$0xff]
        %v807 = vld [vmem:[%s4 + $0x8] sm:$0xff]
        %v808 = vld [vmem:[%s4 + $0x10] sm:$0xff]
        %v809 = vld [vmem:[%s4 + $0x18] sm:$0xff]
        %811 = vset.pattern.permute.xlu0 0
        %812 = vperm.xlu0 %811, %v806
        %v813 = vpop.permute.xlu0 %812
        %816 = vset.pattern.permute.xlu0 0
        %817 = vperm.xlu0 %816, %v807
        %v818 = vpop.permute.xlu0 %817
        %821 = vset.pattern.permute.xlu0 0
        %822 = vperm.xlu0 %821, %v808
        %v823 = vpop.permute.xlu0 %822
        %826 = vset.pattern.permute.xlu0 0
        %827 = vperm.xlu0 %826, %v809
        %v828 = vpop.permute.xlu0 %827
        %v830 = vadd.f32 %v802, %v813
        %v831 = vadd.f32 %v803, %v818
        %v832 = vadd.f32 %v804, %v823
        %v833 = vadd.f32 %v805, %v828
        %v834 = vsel %vm673, %v830, 0.0
        %835 = vadd.xlane.f32.xlu0 %v834
        %v836 = vpop.xlane.xlu0 %835
        %v837 = vsel %vm673, %v831, 0.0
        %838 = vadd.xlane.f32.xlu0 %v837
        %v839 = vpop.xlane.xlu0 %838
        %v840 = vsel %vm673, %v832, 0.0
        %841 = vadd.xlane.f32.xlu0 %v840
        %v842 = vpop.xlane.xlu0 %841
        %v843 = vsel %vm673, %v833, 0.0
        %844 = vadd.xlane.f32.xlu0 %v843
        %v845 = vpop.xlane.xlu0 %844
        %v846 = vrcp.pop 32.0
        %v847 = vmul.f32 32.0, %v846
        %v848 = vsub.f32 1.0, %v847
        %v849 = vmul.f32 %v846, %v848
        %v850 = vadd.f32 %v846, %v849
        %vm851 = vweird.f32 %v846
        %v852 = vsel %vm851, %v846, %v850
        %v853 = vmul.f32 %v836, %v852
        %v854 = vmul.f32 %v839, %v852
        %v855 = vmul.f32 %v842, %v852
        %v856 = vmul.f32 %v845, %v852
        %v857 = vld [vmem:[%s7] sm:$0xff]
        %v858 = vld [vmem:[%s8] sm:$0xff]
        %v860 = vsel %vm673, %v857, 0
        %862 = vmatpush.msra.mxu0 0.0
        %863 = vmatpush.msra.mxu0 0.0
        %864 = vmatpush.msra.mxu0 0.0
        %865 = vmatpush.msra.mxu0 0.0
        %866 = vmatpush.msra.mxu0 0.0
        %867 = vmatpush.msra.mxu0 0.0
        %868 = vmatpush.msra.mxu0 0.0
        %869 = vmatpush.msra.mxu0 0.0
        %870 = vmatpush.msra.mxu0 0.0
        %871 = vmatpush.msra.mxu0 0.0
        %872 = vmatpush.msra.mxu0 0.0
        %873 = vmatpush.msra.mxu0 0.0
        %874 = vmatpush.msra.mxu0 %v856
        %875 = vmatpush.msra.mxu0 %v855
        %876 = vmatpush.msra.mxu0 %v854
        %877 = vmatpush.msra.mxu0 %v853
        %878 = vmatmul.f32.gmra.mxu0 %v860
        %v879 = vpop.f32.mrf.mxu0
        %v880 = vadd.f32 %v858, %v879
        %881 = vdwg.mxu0
        %v882 = vmax.f32 %v880, 0.0
        %v883 = vmin.f32 %v882, 6.0
        %v884 = vld [vmem:[%s9] sm:$0xff]
        %v885 = vld [vmem:[%s9 + $0x8] sm:$0xff]
        %v886 = vld [vmem:[%s9 + $0x10] sm:$0xff]
        %v887 = vld [vmem:[%s9 + $0x18] sm:$0xff]
        %v888 = vld [vmem:[%s10] sm:$0xff]
        %v889 = vld [vmem:[%s10 + $0x8] sm:$0xff]
        %v890 = vld [vmem:[%s10 + $0x10] sm:$0xff]
        %v891 = vld [vmem:[%s10 + $0x18] sm:$0xff]
        %vm892 = vcmask 64512
        %v894 = vsel %vm892, %v884, 0
        %v897 = vsel %vm892, %v885, 0
        %v900 = vsel %vm892, %v886, 0
        %v903 = vsel %vm892, %v887, 0
        %905 = vmatpush.msra.mxu0 0.0
        %906 = vmatpush.msra.mxu0 0.0
        %907 = vmatpush.msra.mxu0 0.0
        %908 = vmatpush.msra.mxu0 0.0
        %909 = vmatpush.msra.mxu0 0.0
        %910 = vmatpush.msra.mxu0 0.0
        %911 = vmatpush.msra.mxu0 0.0
        %912 = vmatpush.msra.mxu0 0.0
        %913 = vmatpush.msra.mxu0 0.0
        %914 = vmatpush.msra.mxu0 0.0
        %915 = vmatpush.msra.mxu0 0.0
        %916 = vmatpush.msra.mxu0 0.0
        %917 = vmatpush.msra.mxu0 0.0
        %918 = vmatpush.msra.mxu0 0.0
        %919 = vmatpush.msra.mxu0 0.0
        %920 = vmatpush.msra.mxu0 %v883
        %921 = vmatmul.f32.gmra.mxu0 %v894
        %v922 = vpop.f32.mrf.mxu0
        %v923 = vadd.f32 %v888, %v922
        %924 = vmatmul.f32.gmra.mxu0 %v897
        %v925 = vpop.f32.mrf.mxu0
        %v926 = vadd.f32 %v889, %v925
        %927 = vmatmul.f32.gmra.mxu0 %v900
        %v928 = vpop.f32.mrf.mxu0
        %v929 = vadd.f32 %v890, %v928
        %930 = vmatmul.f32.gmra.mxu0 %v903
        %v931 = vpop.f32.mrf.mxu0
        %v932 = vadd.f32 %v891, %v931
        %933 = vdwg.mxu0
        %v934 = vxor.u32 %v923, 2147483648
        %v935 = vxor.u32 %v926, 2147483648
        %v936 = vxor.u32 %v929, 2147483648
        %v937 = vxor.u32 %v932, 2147483648
        %v938 = vmul.f32 %v934, 1.442695
        %v939 = vpow.pop %v938
        %v940 = vmul.f32 %v935, 1.442695
        %v941 = vpow.pop %v940
        %v942 = vmul.f32 %v936, 1.442695
        %v943 = vpow.pop %v942
        %v944 = vmul.f32 %v937, 1.442695
        %v945 = vpow.pop %v944
        %v946 = vadd.f32 %v939, 1.0
        %v947 = vadd.f32 %v941, 1.0
        %v948 = vadd.f32 %v943, 1.0
        %v949 = vadd.f32 %v945, 1.0
        %v950 = vrcp.pop %v946
        %v951 = vmul.f32 %v946, %v950
        %v952 = vsub.f32 1.0, %v951
        %v953 = vmul.f32 %v950, %v952
        %v954 = vadd.f32 %v950, %v953
        %vm955 = vweird.f32 %v946
        %vm956 = vweird.f32 %v950
        %vm957 = vmor %vm955, %vm956
        %v958 = vsel %vm957, %v950, %v954
        %v959 = vand.u32 2147483647, %v946
        %vm960 = vcmp.eq.f32.partialorder %v959, 8.507059e+37
        %v961 = vand.u32 %v946, 2147483648
        %v962 = vor.u32 1.1754944e-38, %v961
        %v963 = vsel %vm960, %v962, %v958
        %v964 = vmul.f32 1.0, %v963
        %v965 = vrcp.pop %v947
        %v966 = vmul.f32 %v947, %v965
        %v967 = vsub.f32 1.0, %v966
        %v968 = vmul.f32 %v965, %v967
        %v969 = vadd.f32 %v965, %v968
        %vm970 = vweird.f32 %v947
        %vm971 = vweird.f32 %v965
        %vm972 = vmor %vm970, %vm971
        %v973 = vsel %vm972, %v965, %v969
        %v974 = vand.u32 2147483647, %v947
        %vm975 = vcmp.eq.f32.partialorder %v974, 8.507059e+37
        %v976 = vand.u32 %v947, 2147483648
        %v977 = vor.u32 1.1754944e-38, %v976
        %v978 = vsel %vm975, %v977, %v973
        %v979 = vmul.f32 1.0, %v978
        %v980 = vrcp.pop %v948
        %v981 = vmul.f32 %v948, %v980
        %v982 = vsub.f32 1.0, %v981
        %v983 = vmul.f32 %v980, %v982
        %v984 = vadd.f32 %v980, %v983
        %vm985 = vweird.f32 %v948
        %vm986 = vweird.f32 %v980
        %vm987 = vmor %vm985, %vm986
        %v988 = vsel %vm987, %v980, %v984
        %v989 = vand.u32 2147483647, %v948
        %vm990 = vcmp.eq.f32.partialorder %v989, 8.507059e+37
        %v991 = vand.u32 %v948, 2147483648
        %v992 = vor.u32 1.1754944e-38, %v991
        %v993 = vsel %vm990, %v992, %v988
        %v994 = vmul.f32 1.0, %v993
        %v995 = vrcp.pop %v949
        %v996 = vmul.f32 %v949, %v995
        %v997 = vsub.f32 1.0, %v996
        %v998 = vmul.f32 %v995, %v997
        %v999 = vadd.f32 %v995, %v998
        %vm1000 = vweird.f32 %v949
        %vm1001 = vweird.f32 %v995
        %vm1002 = vmor %vm1000, %vm1001
        %v1003 = vsel %vm1002, %v995, %v999
        %v1004 = vand.u32 2147483647, %v949
        %vm1005 = vcmp.eq.f32.partialorder %v1004, 8.507059e+37
        %v1006 = vand.u32 %v949, 2147483648
        %v1007 = vor.u32 1.1754944e-38, %v1006
        %v1008 = vsel %vm1005, %v1007, %v1003
        %v1009 = vmul.f32 1.0, %v1008
        %v1010 = vld [vmem:[%s5] sm:$0xff]
        %v1011 = vld [vmem:[%s5 + $0x8] sm:$0xff]
        %v1012 = vld [vmem:[%s5 + $0x10] sm:$0xff]
        %v1013 = vld [vmem:[%s5 + $0x18] sm:$0xff]
        %v1014 = vld [vmem:[%s6] sm:$0xff]
        %v1015 = vld [vmem:[%s6 + $0x8] sm:$0xff]
        %v1016 = vld [vmem:[%s6 + $0x10] sm:$0xff]
        %v1017 = vld [vmem:[%s6 + $0x18] sm:$0xff]
        %1019 = vset.pattern.permute.xlu0 0
        %1020 = vperm.xlu0 %1019, %v1014
        %v1021 = vpop.permute.xlu0 %1020
        %1024 = vset.pattern.permute.xlu0 0
        %1025 = vperm.xlu0 %1024, %v1015
        %v1026 = vpop.permute.xlu0 %1025
        %1029 = vset.pattern.permute.xlu0 0
        %1030 = vperm.xlu0 %1029, %v1016
        %v1031 = vpop.permute.xlu0 %1030
        %1034 = vset.pattern.permute.xlu0 0
        %1035 = vperm.xlu0 %1034, %v1017
        %v1036 = vpop.permute.xlu0 %1035
        %v1039 = vsel %vm435, %v1010, 0
        %v1042 = vsel %vm435, %v1011, 0
        %v1045 = vsel %vm435, %v1012, 0
        %v1048 = vsel %vm435, %v1013, 0
        %1050 = vmatpush.msra.mxu0 0.0
        %1051 = vmatpush.msra.mxu0 0.0
        %1052 = vmatpush.msra.mxu0 0.0
        %1053 = vmatpush.msra.mxu0 0.0
        %1054 = vmatpush.msra.mxu0 0.0
        %1055 = vmatpush.msra.mxu0 0.0
        %1056 = vmatpush.msra.mxu0 0.0
        %1057 = vmatpush.msra.mxu0 0.0
        %1058 = vmatpush.msra.mxu0 0.0
        %1059 = vmatpush.msra.mxu0 0.0
        %1060 = vmatpush.msra.mxu0 0.0
        %1061 = vmatpush.msra.mxu0 0.0
        %1062 = vmatpush.msra.mxu0 0.0
        %1063 = vmatpush.msra.mxu0 0.0
        %1064 = vmatpush.msra.mxu0 %v390
        %1065 = vmatpush.msra.mxu0 %v389
        %1066 = vmatmul.f32.gmra.mxu0 %v1039
        %v1067 = vpop.f32.mrf.mxu0
        %v1068 = vadd.f32 %v1021, %v1067
        %1069 = vmatmul.f32.gmra.mxu0 %v1042
        %v1070 = vpop.f32.mrf.mxu0
        %v1071 = vadd.f32 %v1026, %v1070
        %1072 = vmatmul.f32.gmra.mxu0 %v1045
        %v1073 = vpop.f32.mrf.mxu0
        %v1074 = vadd.f32 %v1031, %v1073
        %1075 = vmatmul.f32.gmra.mxu0 %v1048
        %v1076 = vpop.f32.mrf.mxu0
        %v1077 = vadd.f32 %v1036, %v1076
        %1078 = vdwg.mxu0
        %1080 = vset.pattern.permute.xlu0 0
        %1081 = vperm.xlu0 %1080, %v964
        %v1082 = vpop.permute.xlu0 %1081
        %1085 = vset.pattern.permute.xlu0 0
        %1086 = vperm.xlu0 %1085, %v979
        %v1087 = vpop.permute.xlu0 %1086
        %1090 = vset.pattern.permute.xlu0 0
        %1091 = vperm.xlu0 %1090, %v994
        %v1092 = vpop.permute.xlu0 %1091
        %1095 = vset.pattern.permute.xlu0 0
        %1096 = vperm.xlu0 %1095, %v1009
        %v1097 = vpop.permute.xlu0 %1096
        %v1099 = vmul.f32 %v830, %v1082
        %v1100 = vmul.f32 %v831, %v1087
        %v1101 = vmul.f32 %v832, %v1092
        %v1102 = vmul.f32 %v833, %v1097
        %v1103 = vadd.f32 %v1099, %v1068
        %v1104 = vadd.f32 %v1100, %v1071
        %v1105 = vadd.f32 %v1101, %v1074
        %v1106 = vadd.f32 %v1102, %v1077
        %v1107 = vmax.f32 %v1103, 0.0
        %v1108 = vmax.f32 %v1104, 0.0
        %v1109 = vmax.f32 %v1105, 0.0
        %v1110 = vmax.f32 %v1106, 0.0
        %v1111 = vmin.f32 %v1107, 6.0
        %v1112 = vmin.f32 %v1108, 6.0
        %v1113 = vmin.f32 %v1109, 6.0
        %v1114 = vmin.f32 %v1110, 6.0
        %1115 = vst.msk [vmem:[%s379] sm:$0xff] %vm673, %v1111
        %1116 = vst.msk [vmem:[%s379 + $0x8] sm:$0xff] %vm673, %v1112
        %1117 = vst.msk [vmem:[%s379 + $0x10] sm:$0xff] %vm673, %v1113
        %1118 = vst.msk [vmem:[%s379 + $0x18] sm:$0xff] %vm673, %v1114
        %s1119 = sand.u32 %s269, 1
        %s1120 = scalar_lea.sflag [#allocation3], %s1119
        %s1121 = sand.u32 %s269, 1
        %s1122 = smul.addr %s1121, 32
        %s1123 = scalar_lea.vmem [#allocation2], %s1122
        // Predicated region
        $region65: #{tpu_custom_call.1} parent=63 // pred_check
          %p1124 = pneg %p279
        $region66: #{tpu_custom_call.1} parent=63 // pred_check_branch
          %1126 = sbr.rel (%p1124) target = $region68
        $region67: #{tpu_custom_call.1} parent=63 // pred_region
          %1128 = vsyncadd %s1120, 0
          %s1129 = smul.addr %s25, 4
          %s1130 = smul.addr %s1129, 8
          %s1131 = scalar_lea.hbm %s11, %s1130
          %s1132 = sshll.u32 %s1123, 4
          %s1133 = int_to_ptr.vmem [resolvable:$true] %s1132
          %s1134 = sshll.u32 %s1131, 4
          %s1135 = int_to_ptr.hbm [resolvable:$true] %s1134
          %1140 = dma.vmem_to_hbm [thread:$0]  %s1133, 512, %s1135, %s1120, 128, 128, 8
        $region68: #{tpu_custom_call.1} parent=63 // pred_fallthru
          _
      $region64: #{tpu_custom_call.1} parent=5 // pred_fallthru
        _
      %p1141 = scmp.le.s32.totalorder 2, %s20
      // Predicated region
      $region69: #{tpu_custom_call.1} parent=5 // pred_check
        %p1142 = pneg %p1141
      $region70: #{tpu_custom_call.1} parent=5 // pred_check_branch
        %1144 = sbr.rel (%p1142) target = $region72
      $region71: #{tpu_custom_call.1} parent=5 // pred_region
        %s1145 = ssub.s32 %s20, 2
        // Predicated region
        $region73: #{tpu_custom_call.1} parent=71 // pred_check
          %p1146 = pneg %p285
        $region74: #{tpu_custom_call.1} parent=71 // pred_check_branch
          %1148 = sbr.rel (%p1146) target = $region76
        $region75: #{tpu_custom_call.1} parent=71 // pred_region
          %s1149 = sand.u32 %s270, 1
          %s1150 = scalar_lea.sflag [#allocation3], %s1149
          %s1151 = sand.u32 %s270, 1
          %s1152 = smul.addr %s1151, 32
          %s1153 = scalar_lea.vmem [#allocation2], %s1152
          %1155 = dma.done %s1150, 512
        $region76: #{tpu_custom_call.1} parent=71 // pred_fallthru
          _
      $region72: #{tpu_custom_call.1} parent=5 // pred_fallthru
        _
    $region6: #{tpu_custom_call.1} parent=1 // loop_footer
      %s24 = sadd.s32 1, %s20
    $region7: #{tpu_custom_call.1} parent=1 // loop_footer_branch
      %19 = sbr.rel target = $region3
    $region8: #{tpu_custom_call.1} parent=1 // loop_exit
      _
    %1156 = vsyncpa [#allocation3], 1
    %s1157 = scalar_lea.sflag [#allocation3], 1
    %1158 = vsyncpa %s1157, 1

</llo_original>
